<compile_context>
chip_gen: v5e
topology: v5e:2x2
jax: 0.10.0
libtpu: 0.0.40
codegen_flags: <defaults>
</compile_context>

<pallas_src>
import jax
import jax.numpy as jnp
from jax.experimental import pallas as pl
from jax.experimental.pallas import tpu as pltpu


def _make_kernel(m_total, mask_cols):
    """m_total: true number of memory items; mask_cols: True iff M was padded."""

    def kernel(q_ref, qstat_ref, items_ref, istat_ref, loss_ref,
               m0_ref, s0_ref, m1_ref, s1_ref):
        k = pl.program_id(1)

        @pl.when(k == 0)
        def _init():
            m0_ref[...] = jnp.full_like(m0_ref, -jnp.inf)
            m1_ref[...] = jnp.full_like(m1_ref, -jnp.inf)
            s0_ref[...] = jnp.zeros_like(s0_ref)
            s1_ref[...] = jnp.zeros_like(s1_ref)

        # (TQ, C) @ (C, TM) on the MXU in the inputs' native dtype, f32 accumulate.
        logits = jnp.dot(q_ref[...], items_ref[...],
                         preferred_element_type=jnp.float32)       # (TQ, TM) f32
        istat = istat_ref[...]                                      # (1, TM)  f32
        tm = logits.shape[1]

        col = jax.lax.broadcasted_iota(jnp.int32, logits.shape, 1)
        if mask_cols:  # static flag: only emitted when M was padded up to a TM multiple
            logits = jnp.where(col + k * tm < m_total, logits, -jnp.inf)

        # Chunk-local top-2 (first-occurrence tie-break, like the reference top_k).
        c_m0 = jnp.max(logits, axis=1, keepdims=True)
        i0 = jnp.min(jnp.where(logits == c_m0, col, tm), axis=1, keepdims=True)
        mask0 = col == i0
        masked = jnp.where(mask0, -jnp.inf, logits)
        c_m1 = jnp.max(masked, axis=1, keepdims=True)
        i1 = jnp.min(jnp.where(masked == c_m1, col, tm), axis=1, keepdims=True)
        mask1 = col == i1
        # Per-item statistic (||m||^2 - 2*eps*sum(m) + C*eps^2) at the two selected columns.
        c_s0 = jnp.min(jnp.where(mask0, istat, jnp.inf), axis=1, keepdims=True)
        c_s1 = jnp.min(jnp.where(mask1, istat, jnp.inf), axis=1, keepdims=True)

        # Merge the chunk top-2 into the running top-2 (ties keep the earlier chunk/index).
        m0, s0 = m0_ref[...], s0_ref[...]
        m1, s1 = m1_ref[...], s1_ref[...]
        top_new = c_m0 > m0
        n_m0 = jnp.where(top_new, c_m0, m0)
        n_s0 = jnp.where(top_new, c_s0, s0)
        cand_m = jnp.where(top_new, c_m1, c_m0)     # chunk candidate for rank 2
        cand_s = jnp.where(top_new, c_s1, c_s0)
        prev_m = jnp.where(top_new, m0, m1)         # earlier candidate for rank 2
        prev_s = jnp.where(top_new, s0, s1)
        sec_new = cand_m > prev_m
        n_m1 = jnp.where(sec_new, cand_m, prev_m)
        n_s1 = jnp.where(sec_new, cand_s, prev_s)
        m0_ref[...], s0_ref[...] = n_m0, n_s0
        m1_ref[...], s1_ref[...] = n_m1, n_s1

        @pl.when(k == pl.num_programs(1) - 1)
        def _finalize():
            # ||q - m + eps||^2 = q_stat + istat_sel - 2 * (q . m), all (TQ, 1) scalars.
            q_stat = qstat_ref[...]
            d_pos = jnp.sqrt(jnp.maximum(q_stat + n_s0 - 2.0 * n_m0, 0.0))
            d_neg = jnp.sqrt(jnp.maximum(q_stat + n_s1 - 2.0 * n_m1, 0.0))
            loss_ref[...] = jnp.maximum(d_pos - d_neg + 1.0, 0.0)

    return kernel


def _round_up(x, m):
    return ((x + m - 1) // m) * m


def _cdiv(a, b):
    return -(-a // b)


def _vmem_limit_bytes():
    try:
        cap = pltpu.get_tpu_info().vmem_capacity_bytes
    except Exception:
        cap = 64 * 1024 * 1024          # v7x floor; v5e/v6e have 128 MiB
    return int(min(cap * 3 // 4, 100 * 1024 * 1024))


def contrastive_loss(queries, items, temp_param=None, eps=1e-12, reduce=True,
                     tq=None, tm=None):
    """queries: (N, L, C), items: (M, C). Mirrors ContrastiveLoss.forward."""
    del temp_param, eps                  # unused by the torch forward as well
    N, L, C = queries.shape
    M = items.shape[0]
    T = N * L
    q2d = queries.reshape(T, C)          # native dtype; feeds the MXU directly

    # Per-row / per-item statistics for the eps-aware squared distance, computed once
    # outside the kernel: ||q - m + eps||^2 = q_stat + istat - 2*q.m, eps = 1e-6.
    eps_t = jnp.float32(1e-6)
    it32 = items.astype(jnp.float32)
    q32 = q2d.astype(jnp.float32)
    istat = jnp.sum(it32 * (it32 - 2.0 * eps_t), axis=1) + jnp.float32(C) * eps_t * eps_t
    qstat = jnp.sum(q32 * (q32 + 2.0 * eps_t), axis=1, keepdims=True)       # (T, 1) f32

    qb = q2d.dtype.itemsize
    ib = items.dtype.itemsize
    vmem_limit = _vmem_limit_bytes()

    # ---- memory-bank (M) tiling -------------------------------------------------
    if tm is None:
        m_full = _round_up(max(M, 8), 8)
        tm = m_full if (M <= 2048 and 2 * m_full * C * ib <= vmem_limit // 3) else 512
    if tm >= M:
        tm, num_m = _round_up(max(M, 8), 8), 1
    else:
        tm = max(128, _round_up(tm, 128))   # (1, TM) istat row needs lane-aligned blocks
        num_m = _cdiv(M, tm)
        if num_m == 1:
            tm = _round_up(max(M, 8), 8)
    m_pad = tm * num_m
    mask_cols = m_pad != M

    # ---- query (T) tiling: VMEM budget, then split T evenly to minimize padding ---
    resident = 2 * tm * C * ib + 2 * tm * 4                 # items chunk + istat (x2 buffers)
    per_row = 2 * C * qb + 4 * tm * 4 + 4 * 4 + 4 * 128 * 4  # q tile x2, (row,TM) temps,
                                                              # qstat/out x2, top-2 carries
    tq_cap = min(2048, max(8, (vmem_limit - resident - (2 << 20)) // per_row))
    if tq is None:
        num_t = max(1, _cdiv(T, tq_cap))
        tq = _round_up(_cdiv(T, num_t), 8)
        if tq >= 128:
            tq = _round_up(tq, 128)         # MXU/lane-friendly LHS panel height
    else:
        tq = max(8, _round_up(min(tq, _round_up(T, 8)), 8))
    t_pad = _round_up(T, tq)
    num_t = t_pad // tq

    # ---- pad + lay out operands ---------------------------------------------------
    if t_pad != T:
        q2d = jnp.pad(q2d, ((0, t_pad - T), (0, 0)))        # padded rows trimmed below
        qstat = jnp.pad(qstat, ((0, t_pad - T), (0, 0)))
    if m_pad != M:
        items = jnp.pad(items, ((0, m_pad - M), (0, 0)))     # padded cols masked in-kernel
        istat = jnp.pad(istat, (0, m_pad - M))
    items_t = items.T                                        # one-time (C, M) relayout
    istat = istat[None, :]                                   # (1, M_pad)

    losses = pl.pallas_call(
        _make_kernel(M, mask_cols),
        out_shape=jax.ShapeDtypeStruct((t_pad, 1), jnp.float32),
        grid=(num_t, num_m),
        in_specs=[
            pl.BlockSpec((tq, C), lambda i, k: (i, 0)),      # query tile (revisited over k)
            pl.BlockSpec((tq, 1), lambda i, k: (i, 0)),      # per-row q_stat
            pl.BlockSpec((C, tm), lambda i, k: (0, k)),      # memory-bank chunk (pre-transposed)
            pl.BlockSpec((1, tm), lambda i, k: (0, k)),      # per-item statistic chunk
        ],
        out_specs=pl.BlockSpec((tq, 1), lambda i, k: (i, 0)),    # written on the last k only
        scratch_shapes=[pltpu.VMEM((tq, 1), jnp.float32)] * 4,   # running top-2 carry
        compiler_params=pltpu.CompilerParams(
            dimension_semantics=("parallel", "arbitrary"),       # T tiles independent; M is a carry
            vmem_limit_bytes=vmem_limit,
        ),
    )(q2d, qstat, items_t, istat)

    per_elem = losses.reshape(t_pad)[:T]
    if reduce:
        return jnp.mean(per_elem)            # TripletMarginLoss default reduction: mean
    return per_elem.reshape(N, L)            # .view(batch_size, -1)


def _reference(queries, items, reduce=True):
    """Pure-JAX reference matching the PyTorch forward."""
    C = queries.shape[-1]
    q = queries.reshape(-1, C).astype(jnp.float32)
    it = items.astype(jnp.float32)
    score = jax.nn.softmax(q @ it.T, axis=1)
    _, idx = jax.lax.top_k(score, 2)
    pos = it[idx[:, 0]]
    neg = it[idx[:, 1]]
    d_pos = jnp.linalg.norm(q - pos + 1e-6, axis=1)
    d_neg = jnp.linalg.norm(q - neg + 1e-6, axis=1)
    l = jnp.maximum(d_pos - d_neg + 1.0, 0.0)
    if reduce:
        return jnp.mean(l)
    return l.reshape(queries.shape[0], -1)


if __name__ == "__main__":
    key = jax.random.PRNGKey(0)
    k_q, k_m, k_m2, k_m3 = jax.random.split(key, 4)

    N, L, C, M = 2, 8, 32, 16       # queries: N x L x C, memory items: M x C
    queries = jax.random.normal(k_q, (N, L, C), dtype=jnp.float32)
    items = jax.random.normal(k_m, (M, C), dtype=jnp.float32)

    TOL = dict(rtol=1e-4, atol=1e-4)

    # reduce=True path (scalar mean loss), single T tile / single M chunk
    out = jax.block_until_ready(contrastive_loss(queries, items, temp_param=M, reduce=True))
    ref = _reference(queries, items, reduce=True)
    assert jnp.allclose(out, ref, **TOL), (out, ref)

    # reduce=False path (per-query loss, reshaped to N x L)
    out_nr = jax.block_until_ready(contrastive_loss(queries, items, temp_param=M, reduce=False))
    ref_nr = _reference(queries, items, reduce=False)
    assert out_nr.shape == (N, L)
    assert jnp.allclose(out_nr, ref_nr, **TOL)

    # multi-T-tile grid path (tq=8 -> 2 tiles; exercises pipelining + the "parallel" axis)
    out_mt = jax.block_until_ready(contrastive_loss(queries, items, temp_param=M, reduce=True, tq=8))
    assert jnp.allclose(out_mt, ref, **TOL), (out_mt, ref)

    # M-tiled running-top-2 path (M=256, tm=128 -> 2 chunks on the "arbitrary" axis)
    M2 = 256
    items2 = jax.random.normal(k_m2, (M2, C), dtype=jnp.float32)
    out_m2 = jax.block_until_ready(contrastive_loss(queries, items2, temp_param=M2, reduce=True, tm=128))
    ref_m2 = _reference(queries, items2, reduce=True)
    assert jnp.allclose(out_m2, ref_m2, **TOL), (out_m2, ref_m2)

    # M-tiled path with column padding/masking (M=200 padded to 256)
    M3 = 200
    items3 = jax.random.normal(k_m3, (M3, C), dtype=jnp.float32)
    out_m3 = jax.block_until_ready(contrastive_loss(queries, items3, temp_param=M3, reduce=True, tm=128))
    ref_m3 = _reference(queries, items3, reduce=True)
    assert jnp.allclose(out_m3, ref_m3, **TOL), (out_m3, ref_m3)

    # TODO(synk): torch.topk raises for M < 2; this kernel silently yields loss = 0 there.
    print("KERNEL_OK")
</pallas_src>

<mosaic_0001>
module attributes {stable_mosaic.version = 11 : i64} {
  func.func @kernel(%arg0: i32, %arg1: i32, %arg2: memref<16x32xf32, #tpu.memory_space<vmem>>, %arg3: memref<16x1xf32, #tpu.memory_space<vmem>>, %arg4: memref<32x16xf32, #tpu.memory_space<vmem>>, %arg5: memref<1x16xf32, #tpu.memory_space<vmem>>, %arg6: memref<16x1xf32, #tpu.memory_space<vmem>>, %arg7: memref<16x1xf32, #tpu.memory_space<vmem>>, %arg8: memref<16x1xf32, #tpu.memory_space<vmem>>, %arg9: memref<16x1xf32, #tpu.memory_space<vmem>>, %arg10: memref<16x1xf32, #tpu.memory_space<vmem>>) attributes {dimension_semantics = [#tpu.dimension_semantics<parallel>, #tpu.dimension_semantics<arbitrary>], iteration_bounds = array<i64: 1, 1>, scalar_prefetch = 0 : i64, scratch_operands = 4 : i64, tpu.core_type = #tpu.core_type<tc>, window_params = [{transform_indices = @transform_0, window_bounds = array<i64: 16, 32>}, {transform_indices = @transform_1, window_bounds = array<i64: 16, 1>}, {transform_indices = @transform_2, window_bounds = array<i64: 32, 16>}, {transform_indices = @transform_3, window_bounds = array<i64: 1, 16>}, {transform_indices = @transform_4, window_bounds = array<i64: 16, 1>}]} {
    %c0_i32 = arith.constant 0 : i32
    %0 = arith.cmpi eq, %arg1, %c0_i32 : i32
    %1 = arith.extui %0 : i1 to i32
    %c0_i32_0 = arith.constant 0 : i32
    %2 = arith.cmpi ne, %1, %c0_i32_0 : i32
    scf.if %2 {
      %cst_34 = arith.constant 0xFF800000 : f32
      %63 = vector.broadcast %cst_34 : f32 to vector<16x1xf32>
      %c0_35 = arith.constant 0 : index
      %c0_36 = arith.constant 0 : index
      %64 = vector.load %arg7[%c0_35, %c0_36] : memref<16x1xf32, #tpu.memory_space<vmem>>, vector<16x1xf32>
      tpu.vector_store %arg7[%c0_35, %c0_36], %63 {strides = array<i32>} : memref<16x1xf32, #tpu.memory_space<vmem>>, vector<16x1xf32>,
      %cst_37 = arith.constant 0xFF800000 : f32
      %65 = vector.broadcast %cst_37 : f32 to vector<16x1xf32>
      %c0_38 = arith.constant 0 : index
      %c0_39 = arith.constant 0 : index
      %66 = vector.load %arg9[%c0_38, %c0_39] : memref<16x1xf32, #tpu.memory_space<vmem>>, vector<16x1xf32>
      tpu.vector_store %arg9[%c0_38, %c0_39], %65 {strides = array<i32>} : memref<16x1xf32, #tpu.memory_space<vmem>>, vector<16x1xf32>,
      %cst_40 = arith.constant 0.000000e+00 : f32
      %67 = vector.broadcast %cst_40 : f32 to vector<16x1xf32>
      %c0_41 = arith.constant 0 : index
      %c0_42 = arith.constant 0 : index
      %68 = vector.load %arg8[%c0_41, %c0_42] : memref<16x1xf32, #tpu.memory_space<vmem>>, vector<16x1xf32>
      tpu.vector_store %arg8[%c0_41, %c0_42], %67 {strides = array<i32>} : memref<16x1xf32, #tpu.memory_space<vmem>>, vector<16x1xf32>,
      %cst_43 = arith.constant 0.000000e+00 : f32
      %69 = vector.broadcast %cst_43 : f32 to vector<16x1xf32>
      %c0_44 = arith.constant 0 : index
      %c0_45 = arith.constant 0 : index
      %70 = vector.load %arg10[%c0_44, %c0_45] : memref<16x1xf32, #tpu.memory_space<vmem>>, vector<16x1xf32>
      tpu.vector_store %arg10[%c0_44, %c0_45], %69 {strides = array<i32>} : memref<16x1xf32, #tpu.memory_space<vmem>>, vector<16x1xf32>,
    } else {
    }
    %c0 = arith.constant 0 : index
    %c0_1 = arith.constant 0 : index
    %3 = vector.load %arg2[%c0, %c0_1] : memref<16x32xf32, #tpu.memory_space<vmem>>, vector<16x32xf32>
    %c0_2 = arith.constant 0 : index
    %c0_3 = arith.constant 0 : index
    %4 = vector.load %arg4[%c0_2, %c0_3] : memref<32x16xf32, #tpu.memory_space<vmem>>, vector<32x16xf32>
    %cst = arith.constant dense<0.000000e+00> : vector<16x16xf32>
    %5 = tpu.matmul %3, %4, %cst {dimension_numbers = #tpu.dot_dimension_numbers<[1], [0], [0], [1], [0, 0, 1, 1], [], []>} : vector<16x32xf32>, vector<32x16xf32>, vector<16x16xf32> -> vector<16x16xf32>
    %c0_4 = arith.constant 0 : index
    %c0_5 = arith.constant 0 : index
    %6 = vector.load %arg5[%c0_4, %c0_5] : memref<1x16xf32, #tpu.memory_space<vmem>>, vector<1x16xf32>
    %7 = tpu.iota {dimensions = array<i32: 1>} : vector<16x16xi32>
    %cst_6 = arith.constant dense<0xFF800000> : vector<16xf32>
    %8 = vector.multi_reduction <maximumf>, %5, %cst_6 [1] : vector<16x16xf32> to vector<16xf32>
    %9 = vector.shape_cast %8 : vector<16xf32> to vector<16x1xf32>
    %10 = vector.broadcast %9 : vector<16x1xf32> to vector<16x16xf32>
    %11 = arith.cmpf oeq, %5, %10 : vector<16x16xf32>
    %c16_i32 = arith.constant 16 : i32
    %12 = vector.broadcast %c16_i32 : i32 to vector<16x16xi32>
    %13 = arith.select %11, %7, %12 : vector<16x16xi1>, vector<16x16xi32>
    %cst_7 = arith.constant dense<2147483647> : vector<16xi32>
    %14 = vector.multi_reduction <minsi>, %13, %cst_7 [1] : vector<16x16xi32> to vector<16xi32>
    %15 = vector.shape_cast %14 : vector<16xi32> to vector<16x1xi32>
    %16 = vector.broadcast %15 : vector<16x1xi32> to vector<16x16xi32>
    %17 = arith.cmpi eq, %7, %16 : vector<16x16xi32>
    %cst_8 = arith.constant 0xFF800000 : f32
    %18 = vector.broadcast %cst_8 : f32 to vector<16x16xf32>
    %19 = arith.select %17, %18, %5 : vector<16x16xi1>, vector<16x16xf32>
    %cst_9 = arith.constant dense<0xFF800000> : vector<16xf32>
    %20 = vector.multi_reduction <maximumf>, %19, %cst_9 [1] : vector<16x16xf32> to vector<16xf32>
    %21 = vector.shape_cast %20 : vector<16xf32> to vector<16x1xf32>
    %22 = vector.broadcast %21 : vector<16x1xf32> to vector<16x16xf32>
    %23 = arith.cmpf oeq, %19, %22 : vector<16x16xf32>
    %c16_i32_10 = arith.constant 16 : i32
    %24 = vector.broadcast %c16_i32_10 : i32 to vector<16x16xi32>
    %25 = arith.select %23, %7, %24 : vector<16x16xi1>, vector<16x16xi32>
    %cst_11 = arith.constant dense<2147483647> : vector<16xi32>
    %26 = vector.multi_reduction <minsi>, %25, %cst_11 [1] : vector<16x16xi32> to vector<16xi32>
    %27 = vector.shape_cast %26 : vector<16xi32> to vector<16x1xi32>
    %28 = vector.broadcast %27 : vector<16x1xi32> to vector<16x16xi32>
    %29 = arith.cmpi eq, %7, %28 : vector<16x16xi32>
    %cst_12 = arith.constant 0x7F800000 : f32
    %30 = vector.shape_cast %6 : vector<1x16xf32> to vector<1x16xf32>
    %31 = vector.broadcast %30 : vector<1x16xf32> to vector<16x16xf32>
    %32 = vector.broadcast %cst_12 : f32 to vector<16x16xf32>
    %33 = arith.select %17, %31, %32 : vector<16x16xi1>, vector<16x16xf32>
    %cst_13 = arith.constant dense<0x7F800000> : vector<16xf32>
    %34 = vector.multi_reduction <minimumf>, %33, %cst_13 [1] : vector<16x16xf32> to vector<16xf32>
    %35 = vector.shape_cast %34 : vector<16xf32> to vector<16x1xf32>
    %cst_14 = arith.constant 0x7F800000 : f32
    %36 = vector.shape_cast %6 : vector<1x16xf32> to vector<1x16xf32>
    %37 = vector.broadcast %36 : vector<1x16xf32> to vector<16x16xf32>
    %38 = vector.broadcast %cst_14 : f32 to vector<16x16xf32>
    %39 = arith.select %29, %37, %38 : vector<16x16xi1>, vector<16x16xf32>
    %cst_15 = arith.constant dense<0x7F800000> : vector<16xf32>
    %40 = vector.multi_reduction <minimumf>, %39, %cst_15 [1] : vector<16x16xf32> to vector<16xf32>
    %41 = vector.shape_cast %40 : vector<16xf32> to vector<16x1xf32>
    %c0_16 = arith.constant 0 : index
    %c0_17 = arith.constant 0 : index
    %42 = vector.load %arg7[%c0_16, %c0_17] : memref<16x1xf32, #tpu.memory_space<vmem>>, vector<16x1xf32>
    %c0_18 = arith.constant 0 : index
    %c0_19 = arith.constant 0 : index
    %43 = vector.load %arg8[%c0_18, %c0_19] : memref<16x1xf32, #tpu.memory_space<vmem>>, vector<16x1xf32>
    %c0_20 = arith.constant 0 : index
    %c0_21 = arith.constant 0 : index
    %44 = vector.load %arg9[%c0_20, %c0_21] : memref<16x1xf32, #tpu.memory_space<vmem>>, vector<16x1xf32>
    %c0_22 = arith.constant 0 : index
    %c0_23 = arith.constant 0 : index
    %45 = vector.load %arg10[%c0_22, %c0_23] : memref<16x1xf32, #tpu.memory_space<vmem>>, vector<16x1xf32>
    %46 = arith.cmpf ogt, %9, %42 : vector<16x1xf32>
    %47 = arith.select %46, %9, %42 : vector<16x1xi1>, vector<16x1xf32>
    %48 = arith.select %46, %35, %43 : vector<16x1xi1>, vector<16x1xf32>
    %49 = arith.select %46, %21, %9 : vector<16x1xi1>, vector<16x1xf32>
    %50 = arith.select %46, %41, %35 : vector<16x1xi1>, vector<16x1xf32>
    %51 = arith.select %46, %42, %44 : vector<16x1xi1>, vector<16x1xf32>
    %52 = arith.select %46, %43, %45 : vector<16x1xi1>, vector<16x1xf32>
    %53 = arith.cmpf ogt, %49, %51 : vector<16x1xf32>
    %54 = arith.select %53, %49, %51 : vector<16x1xi1>, vector<16x1xf32>
    %55 = arith.select %53, %50, %52 : vector<16x1xi1>, vector<16x1xf32>
    %c0_24 = arith.constant 0 : index
    %c0_25 = arith.constant 0 : index
    %56 = vector.load %arg7[%c0_24, %c0_25] : memref<16x1xf32, #tpu.memory_space<vmem>>, vector<16x1xf32>
    tpu.vector_store %arg7[%c0_24, %c0_25], %47 {strides = array<i32>} : memref<16x1xf32, #tpu.memory_space<vmem>>, vector<16x1xf32>,
    %c0_26 = arith.constant 0 : index
    %c0_27 = arith.constant 0 : index
    %57 = vector.load %arg8[%c0_26, %c0_27] : memref<16x1xf32, #tpu.memory_space<vmem>>, vector<16x1xf32>
    tpu.vector_store %arg8[%c0_26, %c0_27], %48 {strides = array<i32>} : memref<16x1xf32, #tpu.memory_space<vmem>>, vector<16x1xf32>,
    %c0_28 = arith.constant 0 : index
    %c0_29 = arith.constant 0 : index
    %58 = vector.load %arg9[%c0_28, %c0_29] : memref<16x1xf32, #tpu.memory_space<vmem>>, vector<16x1xf32>
    tpu.vector_store %arg9[%c0_28, %c0_29], %54 {strides = array<i32>} : memref<16x1xf32, #tpu.memory_space<vmem>>, vector<16x1xf32>,
    %c0_30 = arith.constant 0 : index
    %c0_31 = arith.constant 0 : index
    %59 = vector.load %arg10[%c0_30, %c0_31] : memref<16x1xf32, #tpu.memory_space<vmem>>, vector<16x1xf32>
    tpu.vector_store %arg10[%c0_30, %c0_31], %55 {strides = array<i32>} : memref<16x1xf32, #tpu.memory_space<vmem>>, vector<16x1xf32>,
    %c0_i32_32 = arith.constant 0 : i32
    %60 = arith.cmpi eq, %arg1, %c0_i32_32 : i32
    %61 = arith.extui %60 : i1 to i32
    %c0_i32_33 = arith.constant 0 : i32
    %62 = arith.cmpi ne, %61, %c0_i32_33 : i32
    scf.if %62 {
      %c0_34 = arith.constant 0 : index
      %c0_35 = arith.constant 0 : index
      %63 = vector.load %arg3[%c0_34, %c0_35] : memref<16x1xf32, #tpu.memory_space<vmem>>, vector<16x1xf32>
      %64 = arith.addf %63, %48 : vector<16x1xf32>
      %cst_36 = arith.constant 2.000000e+00 : f32
      %65 = vector.broadcast %cst_36 : f32 to vector<16x1xf32>
      %66 = arith.mulf %65, %47 : vector<16x1xf32>
      %67 = arith.subf %64, %66 : vector<16x1xf32>
      %cst_37 = arith.constant 0.000000e+00 : f32
      %68 = vector.broadcast %cst_37 : f32 to vector<16x1xf32>
      %69 = arith.maximumf %67, %68 : vector<16x1xf32>
      %70 = math.sqrt %69 : vector<16x1xf32>
      %71 = arith.addf %63, %55 : vector<16x1xf32>
      %cst_38 = arith.constant 2.000000e+00 : f32
      %72 = vector.broadcast %cst_38 : f32 to vector<16x1xf32>
      %73 = arith.mulf %72, %54 : vector<16x1xf32>
      %74 = arith.subf %71, %73 : vector<16x1xf32>
      %cst_39 = arith.constant 0.000000e+00 : f32
      %75 = vector.broadcast %cst_39 : f32 to vector<16x1xf32>
      %76 = arith.maximumf %74, %75 : vector<16x1xf32>
      %77 = math.sqrt %76 : vector<16x1xf32>
      %78 = arith.subf %70, %77 : vector<16x1xf32>
      %cst_40 = arith.constant 1.000000e+00 : f32
      %79 = vector.broadcast %cst_40 : f32 to vector<16x1xf32>
      %80 = arith.addf %78, %79 : vector<16x1xf32>
      %cst_41 = arith.constant 0.000000e+00 : f32
      %81 = vector.broadcast %cst_41 : f32 to vector<16x1xf32>
      %82 = arith.maximumf %80, %81 : vector<16x1xf32>
      %c0_42 = arith.constant 0 : index
      %c0_43 = arith.constant 0 : index
      %83 = vector.load %arg6[%c0_42, %c0_43] : memref<16x1xf32, #tpu.memory_space<vmem>>, vector<16x1xf32>
      tpu.vector_store %arg6[%c0_42, %c0_43], %82 {strides = array<i32>} : memref<16x1xf32, #tpu.memory_space<vmem>>, vector<16x1xf32>,
    } else {
    }
    return
  }
  func.func @transform_0(%arg0: i32, %arg1: i32) -> (i32, i32) {
    %c0_i32 = arith.constant 0 : i32
    %c0_i32_0 = arith.constant 0 : i32
    return %arg0, %c0_i32 : i32, i32
  }
  func.func @transform_1(%arg0: i32, %arg1: i32) -> (i32, i32) {
    %c0_i32 = arith.constant 0 : i32
    %c0_i32_0 = arith.constant 0 : i32
    return %arg0, %c0_i32 : i32, i32
  }
  func.func @transform_2(%arg0: i32, %arg1: i32) -> (i32, i32) {
    %c0_i32 = arith.constant 0 : i32
    %c0_i32_0 = arith.constant 0 : i32
    return %c0_i32, %arg1 : i32, i32
  }
  func.func @transform_3(%arg0: i32, %arg1: i32) -> (i32, i32) {
    %c0_i32 = arith.constant 0 : i32
    %c0_i32_0 = arith.constant 0 : i32
    return %c0_i32, %arg1 : i32, i32
  }
  func.func @transform_4(%arg0: i32, %arg1: i32) -> (i32, i32) {
    %c0_i32 = arith.constant 0 : i32
    %c0_i32_0 = arith.constant 0 : i32
    return %arg0, %c0_i32 : i32, i32
  }
}

</mosaic_0001>

<llo_original>
// kernel: tpu_custom_call.1
$region0: #{tpu_custom_call.1}
  #allocation0 [shape = 'u32[]', space=smem, size = 0x4, offset = 0x4, fixed_abs, tag = 'smem constant byte address 0x4 - core index']
  #allocation1 [shape = 'u32[72,128]{1,0:T(1,128)}', space=vmem, size = 0x9000, scoped, tag = 'internal scratch']
  #allocation2 [shape = 'f32[16,1]{1,0:T(8,128)}', space=vmem, size = 0x2000, scoped, tag = 'scratch operand']
  #allocation3 [shape = 'f32[16,1]{1,0:T(8,128)}', space=vmem, size = 0x2000, scoped, tag = 'scratch operand']
  #allocation4 [shape = 'f32[16,1]{1,0:T(8,128)}', space=vmem, size = 0x2000, scoped, tag = 'scratch operand']
  #allocation5 [shape = 'f32[16,1]{1,0:T(8,128)}', space=vmem, size = 0x2000, scoped, tag = 'scratch operand']
  %s0 = inlined_call_operand.vmem [shape: f32[16,32], index: 0, kind: input, shape index: {}]
  %s1 = inlined_call_operand.vmem [shape: f32[16,1], index: 1, kind: input, shape index: {}]
  %s2 = inlined_call_operand.vmem [shape: f32[32,16], index: 2, kind: input, shape index: {}]
  %s3 = inlined_call_operand.vmem [shape: f32[1,16], index: 3, kind: input, shape index: {}]
  %s4 = inlined_call_operand.vmem [shape: f32[16,1], index: 4, kind: output, shape index: {}]
  %s5 = sld [smem:[#allocation0]]
  $region34: #{tpu_custom_call.1} parent=0
    _
  %s7 = ssub.s32 1, %s5
  %s8 = scalar_select 0, %s7, %s5
  // Predicated region
  $region2: #{tpu_custom_call.1} parent=0 // pred_check
    _
  $region3: #{tpu_custom_call.1} parent=0 // pred_check_branch
    %10 = sbr.rel (0) target = $region5
  $region4: #{tpu_custom_call.1} parent=0 // pred_region
    _
  $region5: #{tpu_custom_call.1} parent=0 // pred_fallthru
    _
  // Predicated region
  $region6: #{tpu_custom_call.1} parent=0 // pred_check
    _
  $region7: #{tpu_custom_call.1} parent=0 // pred_check_branch
    %12 = sbr.rel (0) target = $region9
  $region8: #{tpu_custom_call.1} parent=0 // pred_region
    _
  $region9: #{tpu_custom_call.1} parent=0 // pred_fallthru
    _
  // Predicated region
  $region10: #{tpu_custom_call.1} parent=0 // pred_check
    _
  $region11: #{tpu_custom_call.1} parent=0 // pred_check_branch
    %14 = sbr.rel (0) target = $region13
  $region12: #{tpu_custom_call.1} parent=0 // pred_region
    _
  $region13: #{tpu_custom_call.1} parent=0 // pred_fallthru
    _
  // Predicated region
  $region14: #{tpu_custom_call.1} parent=0 // pred_check
    _
  $region15: #{tpu_custom_call.1} parent=0 // pred_check_branch
    %16 = sbr.rel (0) target = $region17
  $region16: #{tpu_custom_call.1} parent=0 // pred_region
    _
  $region17: #{tpu_custom_call.1} parent=0 // pred_fallthru
    _
  %p17 = scmp.eq.s32.totalorder 0, 0
  // Predicated region
  $region18: #{tpu_custom_call.1} parent=0 // pred_check
    %p18 = pneg %p17
  $region19: #{tpu_custom_call.1} parent=0 // pred_check_branch
    %20 = sbr.rel (%p18) target = $region21
  $region20: #{tpu_custom_call.1} parent=0 // pred_region
    %vm21 = vcmask 7168
    %22 = vst.msk [vmem:[#allocation2] sm:$0xff] %vm21, -inf
    %23 = vst.msk [vmem:[#allocation2 + $0x8] sm:$0xff] %vm21, -inf
    %24 = vst.msk [vmem:[#allocation4] sm:$0xff] %vm21, -inf
    %25 = vst.msk [vmem:[#allocation4 + $0x8] sm:$0xff] %vm21, -inf
    %26 = vst.msk [vmem:[#allocation3] sm:$0xff] %vm21, 0.0
    %27 = vst.msk [vmem:[#allocation3 + $0x8] sm:$0xff] %vm21, 0.0
    %28 = vst.msk [vmem:[#allocation5] sm:$0xff] %vm21, 0.0
    %29 = vst.msk [vmem:[#allocation5 + $0x8] sm:$0xff] %vm21, 0.0
  $region21: #{tpu_custom_call.1} parent=0 // pred_fallthru
    _
  %v30 = vld [vmem:[%s0] sm:$0xff]
  %v31 = vld [vmem:[%s0 + $0x8] sm:$0xff]
  %v32 = vld [vmem:[%s2] sm:$0xff]
  %v33 = vld [vmem:[%s2 + $0x8] sm:$0xff]
  %v34 = vld [vmem:[%s2 + $0x10] sm:$0xff]
  %v35 = vld [vmem:[%s2 + $0x18] sm:$0xff]
  %vm36 = vcmask 261120
  %v38 = vsel %vm36, %v30, 0
  %v41 = vsel %vm36, %v31, 0
  %43 = vmatpush.msra.mxu0 0.0
  %44 = vmatpush.msra.mxu0 0.0
  %45 = vmatpush.msra.mxu0 0.0
  %46 = vmatpush.msra.mxu0 0.0
  %47 = vmatpush.msra.mxu0 0.0
  %48 = vmatpush.msra.mxu0 0.0
  %49 = vmatpush.msra.mxu0 0.0
  %50 = vmatpush.msra.mxu0 0.0
  %51 = vmatpush.msra.mxu0 0.0
  %52 = vmatpush.msra.mxu0 0.0
  %53 = vmatpush.msra.mxu0 0.0
  %54 = vmatpush.msra.mxu0 0.0
  %55 = vmatpush.msra.mxu0 %v35
  %56 = vmatpush.msra.mxu0 %v34
  %57 = vmatpush.msra.mxu0 %v33
  %58 = vmatpush.msra.mxu0 %v32
  %59 = vmatmul.f32.gmra.mxu0 %v38
  %v60 = vpop.f32.mrf.mxu0
  %v61 = vadd.f32 0.0, %v60
  %62 = vmatmul.f32.gmra.mxu0 %v41
  %v63 = vpop.f32.mrf.mxu0
  %v64 = vadd.f32 0.0, %v63
  %65 = vdwg.mxu0
  %v66 = vld [vmem:[%s3] sm:$0x1]
  %v67 = vlaneseq
  %v68 = vand.u32 %v67, 127
  %vm69 = vcmask 130048
  %v70 = vsel %vm69, %v61, -inf
  %71 = vmax.xlane.f32.xlu0 %v70
  %v72 = vpop.xlane.xlu0 %71
  %v73 = vsel %vm69, %v64, -inf
  %74 = vmax.xlane.f32.xlu0 %v73
  %v75 = vpop.xlane.xlu0 %74
  %vm76 = vcmp.eq.f32.partialorder %v61, %v72
  %vm77 = vcmp.eq.f32.partialorder %v64, %v75
  %v78 = vsel %vm76, %v68, 16
  %v79 = vsel %vm77, %v68, 16
  %v80 = vsel %vm69, %v78, 2147483647
  %v81 = vand.u32 %v80, 65535
  %v82 = vshra.s32 %v80, 16
  %v83 = vcvt.s32.f32 %v81
  %v84 = vcvt.s32.f32 %v82
  %85 = vmin.xlane.f32.xlu0 %v84
  %v86 = vpop.xlane.xlu0 %85
  %vm87 = vcmp.eq.f32.partialorder %v84, %v86
  %v88 = vsel %vm87, %v83, inf
  %89 = vmin.xlane.f32.xlu0 %v88
  %v90 = vpop.xlane.xlu0 %89
  %v91 = vcvt.f32.s32 %v90
  %v92 = vcvt.f32.s32 %v86
  %v93 = vshll.u32 %v92, 16
  %v94 = vadd.s32 %v93, %v91
  %v95 = vsel %vm69, %v79, 2147483647
  %v96 = vand.u32 %v95, 65535
  %v97 = vshra.s32 %v95, 16
  %v98 = vcvt.s32.f32 %v96
  %v99 = vcvt.s32.f32 %v97
  %100 = vmin.xlane.f32.xlu0 %v99
  %v101 = vpop.xlane.xlu0 %100
  %vm102 = vcmp.eq.f32.partialorder %v99, %v101
  %v103 = vsel %vm102, %v98, inf
  %104 = vmin.xlane.f32.xlu0 %v103
  %v105 = vpop.xlane.xlu0 %104
  %v106 = vcvt.f32.s32 %v105
  %v107 = vcvt.f32.s32 %v101
  %v108 = vshll.u32 %v107, 16
  %v109 = vadd.s32 %v108, %v106
  %vm110 = vcmp.eq.s32.totalorder %v68, %v94
  %vm111 = vcmp.eq.s32.totalorder %v68, %v109
  %v112 = vsel %vm110, -inf, %v61
  %v113 = vsel %vm111, -inf, %v64
  %v114 = vsel %vm69, %v112, -inf
  %115 = vmax.xlane.f32.xlu0 %v114
  %v116 = vpop.xlane.xlu0 %115
  %v117 = vsel %vm69, %v113, -inf
  %118 = vmax.xlane.f32.xlu0 %v117
  %v119 = vpop.xlane.xlu0 %118
  %vm120 = vcmp.eq.f32.partialorder %v112, %v116
  %vm121 = vcmp.eq.f32.partialorder %v113, %v119
  %v122 = vsel %vm120, %v68, 16
  %v123 = vsel %vm121, %v68, 16
  %v124 = vsel %vm69, %v122, 2147483647
  %v125 = vand.u32 %v124, 65535
  %v126 = vshra.s32 %v124, 16
  %v127 = vcvt.s32.f32 %v125
  %v128 = vcvt.s32.f32 %v126
  %129 = vmin.xlane.f32.xlu0 %v128
  %v130 = vpop.xlane.xlu0 %129
  %vm131 = vcmp.eq.f32.partialorder %v128, %v130
  %v132 = vsel %vm131, %v127, inf
  %133 = vmin.xlane.f32.xlu0 %v132
  %v134 = vpop.xlane.xlu0 %133
  %v135 = vcvt.f32.s32 %v134
  %v136 = vcvt.f32.s32 %v130
  %v137 = vshll.u32 %v136, 16
  %v138 = vadd.s32 %v137, %v135
  %v139 = vsel %vm69, %v123, 2147483647
  %v140 = vand.u32 %v139, 65535
  %v141 = vshra.s32 %v139, 16
  %v142 = vcvt.s32.f32 %v140
  %v143 = vcvt.s32.f32 %v141
  %144 = vmin.xlane.f32.xlu0 %v143
  %v145 = vpop.xlane.xlu0 %144
  %vm146 = vcmp.eq.f32.partialorder %v143, %v145
  %v147 = vsel %vm146, %v142, inf
  %148 = vmin.xlane.f32.xlu0 %v147
  %v149 = vpop.xlane.xlu0 %148
  %v150 = vcvt.f32.s32 %v149
  %v151 = vcvt.f32.s32 %v145
  %v152 = vshll.u32 %v151, 16
  %v153 = vadd.s32 %v152, %v150
  %vm154 = vcmp.eq.s32.totalorder %v68, %v138
  %vm155 = vcmp.eq.s32.totalorder %v68, %v153
  %v157 = vperm.slane %v66, 0
  %v159 = vsel %vm110, %v157, inf
  %v160 = vsel %vm111, %v157, inf
  %v161 = vsel %vm69, %v159, inf
  %162 = vmin.xlane.f32.xlu0 %v161
  %v163 = vpop.xlane.xlu0 %162
  %v164 = vsel %vm69, %v160, inf
  %165 = vmin.xlane.f32.xlu0 %v164
  %v166 = vpop.xlane.xlu0 %165
  %v167 = vsel %vm154, %v157, inf
  %v168 = vsel %vm155, %v157, inf
  %v169 = vsel %vm69, %v167, inf
  %170 = vmin.xlane.f32.xlu0 %v169
  %v171 = vpop.xlane.xlu0 %170
  %v172 = vsel %vm69, %v168, inf
  %173 = vmin.xlane.f32.xlu0 %v172
  %v174 = vpop.xlane.xlu0 %173
  %v175 = vld [vmem:[#allocation2] sm:$0xff]
  %v176 = vld [vmem:[#allocation2 + $0x8] sm:$0xff]
  %v177 = vld [vmem:[#allocation3] sm:$0xff]
  %v178 = vld [vmem:[#allocation3 + $0x8] sm:$0xff]
  %v179 = vld [vmem:[#allocation4] sm:$0xff]
  %v180 = vld [vmem:[#allocation4 + $0x8] sm:$0xff]
  %v181 = vld [vmem:[#allocation5] sm:$0xff]
  %v182 = vld [vmem:[#allocation5 + $0x8] sm:$0xff]
  %vm183 = vcmp.gt.f32.partialorder %v72, %v175
  %vm184 = vcmp.gt.f32.partialorder %v75, %v176
  %v185 = vsel %vm183, %v72, %v175
  %v186 = vsel %vm184, %v75, %v176
  %v187 = vsel %vm183, %v163, %v177
  %v188 = vsel %vm184, %v166, %v178
  %v189 = vsel %vm183, %v116, %v72
  %v190 = vsel %vm184, %v119, %v75
  %v191 = vsel %vm183, %v171, %v163
  %v192 = vsel %vm184, %v174, %v166
  %v193 = vsel %vm183, %v175, %v179
  %v194 = vsel %vm184, %v176, %v180
  %v195 = vsel %vm183, %v177, %v181
  %v196 = vsel %vm184, %v178, %v182
  %vm197 = vcmp.gt.f32.partialorder %v189, %v193
  %vm198 = vcmp.gt.f32.partialorder %v190, %v194
  %v199 = vsel %vm197, %v189, %v193
  %v200 = vsel %vm198, %v190, %v194
  %v201 = vsel %vm197, %v191, %v195
  %v202 = vsel %vm198, %v192, %v196
  %vm203 = vcmask 7168
  %204 = vst.msk [vmem:[#allocation2] sm:$0xff] %vm203, %v185
  %205 = vst.msk [vmem:[#allocation2 + $0x8] sm:$0xff] %vm203, %v186
  %206 = vst.msk [vmem:[#allocation3] sm:$0xff] %vm203, %v187
  %207 = vst.msk [vmem:[#allocation3 + $0x8] sm:$0xff] %vm203, %v188
  %208 = vst.msk [vmem:[#allocation4] sm:$0xff] %vm203, %v199
  %209 = vst.msk [vmem:[#allocation4 + $0x8] sm:$0xff] %vm203, %v200
  %210 = vst.msk [vmem:[#allocation5] sm:$0xff] %vm203, %v201
  %211 = vst.msk [vmem:[#allocation5 + $0x8] sm:$0xff] %vm203, %v202
  // Predicated region
  $region22: #{tpu_custom_call.1} parent=0 // pred_check
    %p212 = pneg %p17
  $region23: #{tpu_custom_call.1} parent=0 // pred_check_branch
    %214 = sbr.rel (%p212) target = $region25
  $region24: #{tpu_custom_call.1} parent=0 // pred_region
    %v215 = vld [vmem:[%s1] sm:$0xff]
    %v216 = vld [vmem:[%s1 + $0x8] sm:$0xff]
    %v217 = vadd.f32 %v215, %v187
    %v218 = vadd.f32 %v216, %v188
    %v219 = vmul.f32 %v185, 2.0
    %v220 = vmul.f32 %v186, 2.0
    %v221 = vsub.f32 %v217, %v219
    %v222 = vsub.f32 %v218, %v220
    %v223 = vmax.f32 %v221, 0.0
    %v224 = vmax.f32 %v222, 0.0
    %v225 = vrsqrt.pop %v223
    %v226 = vmul.f32 %v225, %v223
    %v227 = vmul.f32 %v226, %v225
    %v228 = vmul.f32 0.5, %v227
    %v229 = vsub.f32 1.5, %v228
    %v230 = vmul.f32 %v225, %v229
    %v231 = vmul.f32 %v223, %v230
    %vm232 = vcmp.eq.f32.partialorder %v223, inf
    %v233 = vsel %vm232, %v223, %v231
    %vm234 = vcmp.eq.f32.partialorder %v223, 0.0
    %v235 = vand.u32 %v223, 2147483648
    %v236 = vsel %vm234, %v235, %v233
    %v237 = vrsqrt.pop %v224
    %v238 = vmul.f32 %v237, %v224
    %v239 = vmul.f32 %v238, %v237
    %v240 = vmul.f32 0.5, %v239
    %v241 = vsub.f32 1.5, %v240
    %v242 = vmul.f32 %v237, %v241
    %v243 = vmul.f32 %v224, %v242
    %vm244 = vcmp.eq.f32.partialorder %v224, inf
    %v245 = vsel %vm244, %v224, %v243
    %vm246 = vcmp.eq.f32.partialorder %v224, 0.0
    %v247 = vand.u32 %v224, 2147483648
    %v248 = vsel %vm246, %v247, %v245
    %v249 = vadd.f32 %v215, %v201
    %v250 = vadd.f32 %v216, %v202
    %v251 = vmul.f32 %v199, 2.0
    %v252 = vmul.f32 %v200, 2.0
    %v253 = vsub.f32 %v249, %v251
    %v254 = vsub.f32 %v250, %v252
    %v255 = vmax.f32 %v253, 0.0
    %v256 = vmax.f32 %v254, 0.0
    %v257 = vrsqrt.pop %v255
    %v258 = vmul.f32 %v257, %v255
    %v259 = vmul.f32 %v258, %v257
    %v260 = vmul.f32 0.5, %v259
    %v261 = vsub.f32 1.5, %v260
    %v262 = vmul.f32 %v257, %v261
    %v263 = vmul.f32 %v255, %v262
    %vm264 = vcmp.eq.f32.partialorder %v255, inf
    %v265 = vsel %vm264, %v255, %v263
    %vm266 = vcmp.eq.f32.partialorder %v255, 0.0
    %v267 = vand.u32 %v255, 2147483648
    %v268 = vsel %vm266, %v267, %v265
    %v269 = vrsqrt.pop %v256
    %v270 = vmul.f32 %v269, %v256
    %v271 = vmul.f32 %v270, %v269
    %v272 = vmul.f32 0.5, %v271
    %v273 = vsub.f32 1.5, %v272
    %v274 = vmul.f32 %v269, %v273
    %v275 = vmul.f32 %v256, %v274
    %vm276 = vcmp.eq.f32.partialorder %v256, inf
    %v277 = vsel %vm276, %v256, %v275
    %vm278 = vcmp.eq.f32.partialorder %v256, 0.0
    %v279 = vand.u32 %v256, 2147483648
    %v280 = vsel %vm278, %v279, %v277
    %v281 = vsub.f32 %v236, %v268
    %v282 = vsub.f32 %v248, %v280
    %v283 = vadd.f32 %v281, 1.0
    %v284 = vadd.f32 %v282, 1.0
    %v285 = vmax.f32 %v283, 0.0
    %v286 = vmax.f32 %v284, 0.0
    %287 = vst.msk [vmem:[%s4] sm:$0xff] %vm203, %v285
    %288 = vst.msk [vmem:[%s4 + $0x8] sm:$0xff] %vm203, %v286
  $region25: #{tpu_custom_call.1} parent=0 // pred_fallthru
    _
  // Predicated region
  $region26: #{tpu_custom_call.1} parent=0 // pred_check
    _
  $region27: #{tpu_custom_call.1} parent=0 // pred_check_branch
    %290 = sbr.rel (0) target = $region29
  $region28: #{tpu_custom_call.1} parent=0 // pred_region
    _
  $region29: #{tpu_custom_call.1} parent=0 // pred_fallthru
    _
  // Predicated region
  $region30: #{tpu_custom_call.1} parent=0 // pred_check
    _
  $region31: #{tpu_custom_call.1} parent=0 // pred_check_branch
    %292 = sbr.rel (0) target = $region33
  $region32: #{tpu_custom_call.1} parent=0 // pred_region
    _
  $region33: #{tpu_custom_call.1} parent=0 // pred_fallthru
    _

</llo_original>
